<compile_context>
chip_gen: v7x
topology: tpu7x:2x2x1
jax: 0.10.0
libtpu: 0.0.40
codegen_flags: <defaults>
</compile_context>

<pallas_src>
import jax
import jax.numpy as jnp
from jax import lax
from jax.experimental import pallas as pl
from jax.experimental.pallas import tpu as pltpu


def _round_up(x, m):
    return (x + m - 1) // m * m


def _cdiv(a, b):
    return -(-a // b)


def _mlp3_kernel(x_ref, a_ref, w1f_ref, w1a_ref, b1_ref,
                 w2_ref, b2_ref, w3_ref, b3_ref, o_ref):
    """Fused 3-layer MLP over one (tm, ...) batch tile.

    x_ref:   bf16[tm, F]   feature tile (streamed)
    a_ref:   i32 [tm, 1]   action tile  (streamed, 4 B/row)
    w1f_ref: bf16[F,  Hp]  W1 feature rows   (VMEM-resident)
    w1a_ref: bf16[A,  Hp]  W1 action rows    (VMEM-resident)
    b1_ref:  f32 [1,  Hp]
    w2_ref:  bf16[Hp, Hp]
    b2_ref:  f32 [1,  Hp]
    w3_ref:  bf16[Hp, Fo]
    b3_ref:  f32 [1,  Fo]
    o_ref:   f32 [tm, Fo]
    """
    dot_dtype = w1f_ref.dtype
    tm = a_ref.shape[0]
    A = w1a_ref.shape[0]

    # one_hot(action) built in-kernel: [tm, A] bf16 (exact 0/1 values).
    act = a_ref[...]                                        # i32 [tm, 1]
    lane = lax.broadcasted_iota(jnp.int32, (tm, A), 1)      # i32 [tm, A]
    onehot = (act == lane).astype(dot_dtype)                # bf16 [tm, A]

    # Layer 1: feature part + one-hot part on the MXU (f32 accumulation),
    # bias added in f32 before the ReLU (v5e-safe epilogue).
    h1 = (jnp.dot(x_ref[...], w1f_ref[...], preferred_element_type=jnp.float32)
          + jnp.dot(onehot, w1a_ref[...], preferred_element_type=jnp.float32)
          + b1_ref[...])
    h1 = jnp.maximum(h1, 0.0)

    h2 = jnp.dot(h1.astype(dot_dtype), w2_ref[...],
                 preferred_element_type=jnp.float32) + b2_ref[...]
    h2 = jnp.maximum(h2, 0.0)

    h3 = jnp.dot(h2.astype(dot_dtype), w3_ref[...],
                 preferred_element_type=jnp.float32) + b3_ref[...]
    h3 = jnp.maximum(h3, 0.0)

    o_ref[...] = h3.astype(o_ref.dtype)


def forward_pallas(feature, action, params, action_size, *,
                   dot_dtype=jnp.bfloat16, tm_cap=1024):
    """JAX wrapper mirroring Forward.forward.

    feature: f32[B, F]
    action:  i32[B]
    params:  dict of w1,b1,w2,b2,w3,b3 with weights stored as [in, out]
             (transpose of PyTorch's [out, in]).
    """
    B, F = feature.shape
    A = action_size
    H = params["w2"].shape[0]      # 2F
    Fo = params["w3"].shape[1]     # F (output width)
    Hp = _round_up(H, 128)         # lane-dense hidden width

    # --- VMEM-resident weights: bf16, hidden width zero-padded to Hp ----------
    w1 = params["w1"].astype(dot_dtype)                               # [F+A, H]
    w1f = jnp.pad(w1[:F], ((0, 0), (0, Hp - H)))                      # [F, Hp]
    w1a = jnp.pad(w1[F:F + A], ((0, 0), (0, Hp - H)))                 # [A, Hp]
    b1 = jnp.pad(params["b1"].astype(jnp.float32), ((0, 0), (0, Hp - H)))   # [1, Hp]
    w2 = jnp.pad(params["w2"].astype(dot_dtype), ((0, Hp - H), (0, Hp - H)))  # [Hp, Hp]
    b2 = jnp.pad(params["b2"].astype(jnp.float32), ((0, 0), (0, Hp - H)))   # [1, Hp]
    w3 = jnp.pad(params["w3"].astype(dot_dtype), ((0, Hp - H), (0, 0)))     # [Hp, Fo]
    b3 = params["b3"].astype(jnp.float32)                                   # [1, Fo]

    # --- streamed activations: bf16 features + raw i32 actions ---------------
    feat = feature.astype(dot_dtype)                                  # [B, F] bf16
    act = action.astype(jnp.int32).reshape(B, 1)                      # [B, 1] i32

    # --- batch tiling ---------------------------------------------------------
    # Large tiles (mem-bound), >=2 grid steps so v7x megacore is used, >=4 steps
    # for moderate B so each core still pipelines; padding bounded by ~8 rows/step.
    if B >= 64:
        min_steps = 4
    elif B >= 16:
        min_steps = 2
    else:
        min_steps = 1
    n_steps = max(min_steps, _cdiv(B, tm_cap))
    tm = _round_up(_cdiv(B, n_steps), 8)
    n_steps = _cdiv(B, tm)
    Bp = n_steps * tm
    if Bp != B:
        feat = jnp.pad(feat, ((0, Bp - B), (0, 0)))
        act = jnp.pad(act, ((0, Bp - B), (0, 0)))   # pads with action 0 (valid row)

    tiled = lambda w: pl.BlockSpec((tm, w), lambda i: (i, 0))   # batch-tiled stream
    fixed = lambda shape: pl.BlockSpec(shape, lambda i: (0, 0))  # VMEM-resident

    # --- advisory cost estimate (actual executed flops / streamed bytes) -----
    w_bytes = sum(int(a.size) * a.dtype.itemsize
                  for a in (w1f, w1a, b1, w2, b2, w3, b3))
    flops = 2 * Bp * (F * Hp + A * Hp + Hp * Hp + Hp * Fo)
    bytes_accessed = int(Bp * F * 2 + Bp * 4 + Bp * Fo * 4 + w_bytes)

    out = pl.pallas_call(
        _mlp3_kernel,
        out_shape=jax.ShapeDtypeStruct((Bp, Fo), jnp.float32),
        grid_spec=pltpu.PrefetchScalarGridSpec(
            num_scalar_prefetch=0,
            grid=(n_steps,),
            in_specs=[
                tiled(F),            # feature tile (bf16)
                tiled(1),            # action tile (i32)
                fixed((F, Hp)),      # W1 feature rows
                fixed((A, Hp)),      # W1 action rows
                fixed((1, Hp)),      # b1
                fixed((Hp, Hp)),     # W2
                fixed((1, Hp)),      # b2
                fixed((Hp, Fo)),     # W3
                fixed((1, Fo)),      # b3
            ],
            out_specs=tiled(Fo),     # full-extent Fo lanes: no padding / no slice pass
        ),
        compiler_params=pltpu.CompilerParams(
            dimension_semantics=("parallel",),
        ),
        cost_estimate=pl.CostEstimate(
            flops=flops, transcendentals=0, bytes_accessed=bytes_accessed),
    )(feat, act, w1f, w1a, b1, w2, b2, w3, b3)

    return out[:B] if Bp != B else out


def init_params(key, action_size, feature_size):
    """Deterministic init matching torch.nn.Linear (U(-1/sqrt(fan_in), 1/sqrt(fan_in)))."""
    in1 = feature_size + action_size
    hid = feature_size * 2
    dims = [(in1, hid), (hid, hid), (hid, feature_size)]
    params = {}
    keys = jax.random.split(key, 6)
    for i, (fan_in, fan_out) in enumerate(dims):
        bound = 1.0 / (fan_in ** 0.5)
        w = jax.random.uniform(keys[2 * i], (fan_in, fan_out),
                               minval=-bound, maxval=bound, dtype=jnp.float32)
        b = jax.random.uniform(keys[2 * i + 1], (1, fan_out),
                               minval=-bound, maxval=bound, dtype=jnp.float32)
        params[f"w{i + 1}"] = w
        params[f"b{i + 1}"] = b
    return params


def forward_ref(feature, action, params, action_size, dot_dtype=jnp.bfloat16):
    """Reference with the same numerics as the kernel (bf16 dot operands, f32 accum)."""
    x = jnp.concatenate(
        [feature, jax.nn.one_hot(action, action_size, dtype=jnp.float32)], axis=-1)

    def layer(x, w, b):
        y = jnp.dot(x.astype(dot_dtype), w.astype(dot_dtype),
                    preferred_element_type=jnp.float32) + b
        return jnp.maximum(y, 0.0)

    x = layer(x, params["w1"], params["b1"])
    x = layer(x, params["w2"], params["b2"])
    x = layer(x, params["w3"], params["b3"])
    return x


def forward_ref_f32(feature, action, params, action_size):
    """Pure-f32 reference of the original module semantics."""
    x = jnp.concatenate(
        [feature, jax.nn.one_hot(action, action_size, dtype=jnp.float32)], axis=-1)
    x = jnp.maximum(x @ params["w1"] + params["b1"], 0.0)
    x = jnp.maximum(x @ params["w2"] + params["b2"], 0.0)
    x = jnp.maximum(x @ params["w3"] + params["b3"], 0.0)
    return x


if __name__ == "__main__":
    action_size = 4
    feature_size = 32

    key = jax.random.PRNGKey(0)
    k_param, k_feat, k_act = jax.random.split(key, 3)
    params = init_params(k_param, action_size, feature_size)

    # --- primary check: batch = 8 (single grid step) -------------------------
    batch = 8
    feature = jax.random.normal(k_feat, (batch, feature_size), dtype=jnp.float32)
    action = jax.random.randint(k_act, (batch,), 0, action_size, dtype=jnp.int32)

    out = forward_pallas(feature, action, params, action_size)
    out = jax.block_until_ready(out)

    ref_same = forward_ref(feature, action, params, action_size)       # bf16-matched
    ref_f32 = forward_ref_f32(feature, action, params, action_size)    # module semantics

    assert out.shape == (batch, feature_size)
    assert jnp.allclose(out, ref_same, atol=2e-3, rtol=2e-3), \
        "Pallas output mismatch vs bf16-matched reference (batch=8)"
    assert jnp.allclose(out, ref_f32, atol=5e-2, rtol=5e-2), \
        "Pallas output mismatch vs f32 reference (batch=8)"

    # --- secondary check: batch = 40 (multi-step grid + batch padding path) --
    batch2 = 40
    k_feat2, k_act2 = jax.random.split(jax.random.PRNGKey(1))
    feature2 = jax.random.normal(k_feat2, (batch2, feature_size), dtype=jnp.float32)
    action2 = jax.random.randint(k_act2, (batch2,), 0, action_size, dtype=jnp.int32)

    out2 = jax.block_until_ready(forward_pallas(feature2, action2, params, action_size))
    ref2 = forward_ref(feature2, action2, params, action_size)
    assert out2.shape == (batch2, feature_size)
    assert jnp.allclose(out2, ref2, atol=2e-3, rtol=2e-3), \
        "Pallas output mismatch vs bf16-matched reference (batch=40)"

    print("KERNEL_OK")
</pallas_src>

<mosaic_0001>
module attributes {stable_mosaic.version = 11 : i64} {
  func.func @_mlp3_kernel(%arg0: i32, %arg1: memref<8x32xbf16, #tpu.memory_space<vmem>>, %arg2: memref<8x1xi32, #tpu.memory_space<vmem>>, %arg3: memref<32x128xbf16, #tpu.memory_space<vmem>>, %arg4: memref<4x128xbf16, #tpu.memory_space<vmem>>, %arg5: memref<1x128xf32, #tpu.memory_space<vmem>>, %arg6: memref<128x128xbf16, #tpu.memory_space<vmem>>, %arg7: memref<1x128xf32, #tpu.memory_space<vmem>>, %arg8: memref<128x32xbf16, #tpu.memory_space<vmem>>, %arg9: memref<1x32xf32, #tpu.memory_space<vmem>>, %arg10: memref<8x32xf32, #tpu.memory_space<vmem>>) attributes {dimension_semantics = [#tpu.dimension_semantics<parallel>], iteration_bounds = array<i64: 1>, scalar_prefetch = 0 : i64, scratch_operands = 0 : i64, tpu.core_type = #tpu.core_type<tc>, window_params = [{transform_indices = @transform_0, window_bounds = array<i64: 8, 32>}, {transform_indices = @transform_1, window_bounds = array<i64: 8, 1>}, {pipeline_mode = #tpu.pipeline_mode<synchronous>, transform_indices = @transform_2, window_bounds = array<i64: 32, 128>}, {pipeline_mode = #tpu.pipeline_mode<synchronous>, transform_indices = @transform_3, window_bounds = array<i64: 4, 128>}, {pipeline_mode = #tpu.pipeline_mode<synchronous>, transform_indices = @transform_4, window_bounds = array<i64: 1, 128>}, {pipeline_mode = #tpu.pipeline_mode<synchronous>, transform_indices = @transform_5, window_bounds = array<i64: 128, 128>}, {pipeline_mode = #tpu.pipeline_mode<synchronous>, transform_indices = @transform_6, window_bounds = array<i64: 1, 128>}, {pipeline_mode = #tpu.pipeline_mode<synchronous>, transform_indices = @transform_7, window_bounds = array<i64: 128, 32>}, {pipeline_mode = #tpu.pipeline_mode<synchronous>, transform_indices = @transform_8, window_bounds = array<i64: 1, 32>}, {transform_indices = @transform_9, window_bounds = array<i64: 8, 32>}]} {
    %c0 = arith.constant 0 : index
    %c0_0 = arith.constant 0 : index
    %0 = vector.load %arg2[%c0, %c0_0] : memref<8x1xi32, #tpu.memory_space<vmem>>, vector<8x1xi32>
    %1 = tpu.iota {dimensions = array<i32: 1>} : vector<8x4xi32>
    %2 = vector.broadcast %0 : vector<8x1xi32> to vector<8x4xi32>
    %3 = arith.cmpi eq, %2, %1 : vector<8x4xi32>
    %4 = arith.extui %3 : vector<8x4xi1> to vector<8x4xi32>
    %5 = arith.sitofp %4 : vector<8x4xi32> to vector<8x4xf32>
    %6 = arith.truncf %5 : vector<8x4xf32> to vector<8x4xbf16>
    %c0_1 = arith.constant 0 : index
    %c0_2 = arith.constant 0 : index
    %7 = vector.load %arg1[%c0_1, %c0_2] : memref<8x32xbf16, #tpu.memory_space<vmem>>, vector<8x32xbf16>
    %c0_3 = arith.constant 0 : index
    %c0_4 = arith.constant 0 : index
    %8 = vector.load %arg3[%c0_3, %c0_4] : memref<32x128xbf16, #tpu.memory_space<vmem>>, vector<32x128xbf16>
    %cst = arith.constant dense<0.000000e+00> : vector<8x128xf32>
    %9 = tpu.matmul %7, %8, %cst {dimension_numbers = #tpu.dot_dimension_numbers<[1], [0], [0], [1], [0, 0, 1, 1], [], []>} : vector<8x32xbf16>, vector<32x128xbf16>, vector<8x128xf32> -> vector<8x128xf32>
    %c0_5 = arith.constant 0 : index
    %c0_6 = arith.constant 0 : index
    %10 = vector.load %arg4[%c0_5, %c0_6] : memref<4x128xbf16, #tpu.memory_space<vmem>>, vector<4x128xbf16>
    %cst_7 = arith.constant dense<0.000000e+00> : vector<8x128xf32>
    %11 = tpu.matmul %6, %10, %cst_7 {dimension_numbers = #tpu.dot_dimension_numbers<[1], [0], [0], [1], [0, 0, 1, 1], [], []>} : vector<8x4xbf16>, vector<4x128xbf16>, vector<8x128xf32> -> vector<8x128xf32>
    %12 = arith.addf %9, %11 : vector<8x128xf32>
    %c0_8 = arith.constant 0 : index
    %c0_9 = arith.constant 0 : index
    %13 = vector.load %arg5[%c0_8, %c0_9] : memref<1x128xf32, #tpu.memory_space<vmem>>, vector<1x128xf32>
    %14 = vector.broadcast %13 : vector<1x128xf32> to vector<8x128xf32>
    %15 = arith.addf %12, %14 : vector<8x128xf32>
    %cst_10 = arith.constant 0.000000e+00 : f32
    %16 = vector.broadcast %cst_10 : f32 to vector<8x128xf32>
    %17 = arith.maximumf %15, %16 : vector<8x128xf32>
    %18 = arith.truncf %17 : vector<8x128xf32> to vector<8x128xbf16>
    %c0_11 = arith.constant 0 : index
    %c0_12 = arith.constant 0 : index
    %19 = vector.load %arg6[%c0_11, %c0_12] : memref<128x128xbf16, #tpu.memory_space<vmem>>, vector<128x128xbf16>
    %cst_13 = arith.constant dense<0.000000e+00> : vector<8x128xf32>
    %20 = tpu.matmul %18, %19, %cst_13 {dimension_numbers = #tpu.dot_dimension_numbers<[1], [0], [0], [1], [0, 0, 1, 1], [], []>} : vector<8x128xbf16>, vector<128x128xbf16>, vector<8x128xf32> -> vector<8x128xf32>
    %c0_14 = arith.constant 0 : index
    %c0_15 = arith.constant 0 : index
    %21 = vector.load %arg7[%c0_14, %c0_15] : memref<1x128xf32, #tpu.memory_space<vmem>>, vector<1x128xf32>
    %22 = vector.broadcast %21 : vector<1x128xf32> to vector<8x128xf32>
    %23 = arith.addf %20, %22 : vector<8x128xf32>
    %cst_16 = arith.constant 0.000000e+00 : f32
    %24 = vector.broadcast %cst_16 : f32 to vector<8x128xf32>
    %25 = arith.maximumf %23, %24 : vector<8x128xf32>
    %26 = arith.truncf %25 : vector<8x128xf32> to vector<8x128xbf16>
    %c0_17 = arith.constant 0 : index
    %c0_18 = arith.constant 0 : index
    %27 = vector.load %arg8[%c0_17, %c0_18] : memref<128x32xbf16, #tpu.memory_space<vmem>>, vector<128x32xbf16>
    %cst_19 = arith.constant dense<0.000000e+00> : vector<8x32xf32>
    %28 = tpu.matmul %26, %27, %cst_19 {dimension_numbers = #tpu.dot_dimension_numbers<[1], [0], [0], [1], [0, 0, 1, 1], [], []>} : vector<8x128xbf16>, vector<128x32xbf16>, vector<8x32xf32> -> vector<8x32xf32>
    %c0_20 = arith.constant 0 : index
    %c0_21 = arith.constant 0 : index
    %29 = vector.load %arg9[%c0_20, %c0_21] : memref<1x32xf32, #tpu.memory_space<vmem>>, vector<1x32xf32>
    %30 = vector.broadcast %29 : vector<1x32xf32> to vector<8x32xf32>
    %31 = arith.addf %28, %30 : vector<8x32xf32>
    %cst_22 = arith.constant 0.000000e+00 : f32
    %32 = vector.broadcast %cst_22 : f32 to vector<8x32xf32>
    %33 = arith.maximumf %31, %32 : vector<8x32xf32>
    %c0_23 = arith.constant 0 : index
    %c0_24 = arith.constant 0 : index
    %34 = vector.load %arg10[%c0_23, %c0_24] : memref<8x32xf32, #tpu.memory_space<vmem>>, vector<8x32xf32>
    tpu.vector_store %arg10[%c0_23, %c0_24], %33 {strides = array<i32>} : memref<8x32xf32, #tpu.memory_space<vmem>>, vector<8x32xf32>,
    return
  }
  func.func @transform_0(%arg0: i32) -> (i32, i32) {
    %c0_i32 = arith.constant 0 : i32
    %c0_i32_0 = arith.constant 0 : i32
    return %arg0, %c0_i32 : i32, i32
  }
  func.func @transform_1(%arg0: i32) -> (i32, i32) {
    %c0_i32 = arith.constant 0 : i32
    %c0_i32_0 = arith.constant 0 : i32
    return %arg0, %c0_i32 : i32, i32
  }
  func.func @transform_2(%arg0: i32) -> (i32, i32) {
    %c0_i32 = arith.constant 0 : i32
    %c0_i32_0 = arith.constant 0 : i32
    %c0_i32_1 = arith.constant 0 : i32
    return %c0_i32, %c0_i32_0 : i32, i32
  }
  func.func @transform_3(%arg0: i32) -> (i32, i32) {
    %c0_i32 = arith.constant 0 : i32
    %c0_i32_0 = arith.constant 0 : i32
    %c0_i32_1 = arith.constant 0 : i32
    return %c0_i32, %c0_i32_0 : i32, i32
  }
  func.func @transform_4(%arg0: i32) -> (i32, i32) {
    %c0_i32 = arith.constant 0 : i32
    %c0_i32_0 = arith.constant 0 : i32
    %c0_i32_1 = arith.constant 0 : i32
    return %c0_i32, %c0_i32_0 : i32, i32
  }
  func.func @transform_5(%arg0: i32) -> (i32, i32) {
    %c0_i32 = arith.constant 0 : i32
    %c0_i32_0 = arith.constant 0 : i32
    %c0_i32_1 = arith.constant 0 : i32
    return %c0_i32, %c0_i32_0 : i32, i32
  }
  func.func @transform_6(%arg0: i32) -> (i32, i32) {
    %c0_i32 = arith.constant 0 : i32
    %c0_i32_0 = arith.constant 0 : i32
    %c0_i32_1 = arith.constant 0 : i32
    return %c0_i32, %c0_i32_0 : i32, i32
  }
  func.func @transform_7(%arg0: i32) -> (i32, i32) {
    %c0_i32 = arith.constant 0 : i32
    %c0_i32_0 = arith.constant 0 : i32
    %c0_i32_1 = arith.constant 0 : i32
    return %c0_i32, %c0_i32_0 : i32, i32
  }
  func.func @transform_8(%arg0: i32) -> (i32, i32) {
    %c0_i32 = arith.constant 0 : i32
    %c0_i32_0 = arith.constant 0 : i32
    %c0_i32_1 = arith.constant 0 : i32
    return %c0_i32, %c0_i32_0 : i32, i32
  }
  func.func @transform_9(%arg0: i32) -> (i32, i32) {
    %c0_i32 = arith.constant 0 : i32
    %c0_i32_0 = arith.constant 0 : i32
    return %arg0, %c0_i32 : i32, i32
  }
}

</mosaic_0001>

<llo_original>
// kernel: tpu_custom_call.1
$region0: #{tpu_custom_call.1}
  #allocation0 [shape = 'u32[]', space=smem, size = 0x4, offset = 0x4, fixed_abs, tag = 'smem constant byte address 0x4 - core index']
  #allocation1 [shape = 'u32[144,128]{1,0:T(1,128)}', space=vmem, size = 0x12000, scoped, tag = 'internal scratch']
  %s0 = inlined_call_operand.vmem [shape: bf16[8,32], index: 0, kind: input, shape index: {}]
  %s1 = inlined_call_operand.vmem [shape: s32[8,1], index: 1, kind: input, shape index: {}]
  %s2 = inlined_call_operand.vmem [shape: bf16[32,128], index: 2, kind: input, shape index: {}]
  %s3 = inlined_call_operand.vmem [shape: bf16[4,128], index: 3, kind: input, shape index: {}]
  %s4 = inlined_call_operand.vmem [shape: f32[1,128], index: 4, kind: input, shape index: {}]
  %s5 = inlined_call_operand.vmem [shape: bf16[128,128], index: 5, kind: input, shape index: {}]
  %s6 = inlined_call_operand.vmem [shape: f32[1,128], index: 6, kind: input, shape index: {}]
  %s7 = inlined_call_operand.vmem [shape: bf16[128,32], index: 7, kind: input, shape index: {}]
  %s8 = inlined_call_operand.vmem [shape: f32[1,32], index: 8, kind: input, shape index: {}]
  %s9 = inlined_call_operand.hbm [shape: f32[8,32], index: 9, kind: output, shape index: {}]
  %s10 = sld [smem:[#allocation0]]
  $region46: #{tpu_custom_call.1} parent=0
    _
  %s12 = ssub.s32 1, %s10
  %s13 = scalar_select 0, %s12, %s10
  $region1: #{tpu_custom_call.1} parent=0
    #allocation2 [shape = 'u8[4096]{0}', space=vmem, size = 0x1000, scoped, tag = 'output window, operand 0, single buffered']
    #allocation3 [shape = 's32[1]{0}', space=sflag, size = 0x4, scoped, tag = 'scoped memory for tpu_custom_call.1']
    %14 = vsyncpa [#allocation3], 0
    // Predicated region
    $region2: #{tpu_custom_call.1} parent=1 // pred_check
      _
    $region3: #{tpu_custom_call.1} parent=1 // pred_check_branch
      %16 = sbr.rel (0) target = $region5
    $region4: #{tpu_custom_call.1} parent=1 // pred_region
      _
    $region5: #{tpu_custom_call.1} parent=1 // pred_fallthru
      _
    // Predicated region
    $region6: #{tpu_custom_call.1} parent=1 // pred_check
      _
    $region7: #{tpu_custom_call.1} parent=1 // pred_check_branch
      %18 = sbr.rel (0) target = $region9
    $region8: #{tpu_custom_call.1} parent=1 // pred_region
      _
    $region9: #{tpu_custom_call.1} parent=1 // pred_fallthru
      _
    // Predicated region
    $region10: #{tpu_custom_call.1} parent=1 // pred_check
      _
    $region11: #{tpu_custom_call.1} parent=1 // pred_check_branch
      %20 = sbr.rel (0) target = $region13
    $region12: #{tpu_custom_call.1} parent=1 // pred_region
      _
    $region13: #{tpu_custom_call.1} parent=1 // pred_fallthru
      _
    // Predicated region
    $region14: #{tpu_custom_call.1} parent=1 // pred_check
      _
    $region15: #{tpu_custom_call.1} parent=1 // pred_check_branch
      %22 = sbr.rel (0) target = $region17
    $region16: #{tpu_custom_call.1} parent=1 // pred_region
      _
    $region17: #{tpu_custom_call.1} parent=1 // pred_fallthru
      _
    // Predicated region
    $region18: #{tpu_custom_call.1} parent=1 // pred_check
      _
    $region19: #{tpu_custom_call.1} parent=1 // pred_check_branch
      %24 = sbr.rel (0) target = $region21
    $region20: #{tpu_custom_call.1} parent=1 // pred_region
      _
    $region21: #{tpu_custom_call.1} parent=1 // pred_fallthru
      _
    // Predicated region
    $region22: #{tpu_custom_call.1} parent=1 // pred_check
      _
    $region23: #{tpu_custom_call.1} parent=1 // pred_check_branch
      %26 = sbr.rel (0) target = $region25
    $region24: #{tpu_custom_call.1} parent=1 // pred_region
      _
    $region25: #{tpu_custom_call.1} parent=1 // pred_fallthru
      _
    // Predicated region
    $region26: #{tpu_custom_call.1} parent=1 // pred_check
      _
    $region27: #{tpu_custom_call.1} parent=1 // pred_check_branch
      %28 = sbr.rel (0) target = $region29
    $region28: #{tpu_custom_call.1} parent=1 // pred_region
      _
    $region29: #{tpu_custom_call.1} parent=1 // pred_fallthru
      _
    // Predicated region
    $region30: #{tpu_custom_call.1} parent=1 // pred_check
      _
    $region31: #{tpu_custom_call.1} parent=1 // pred_check_branch
      %30 = sbr.rel (0) target = $region33
    $region32: #{tpu_custom_call.1} parent=1 // pred_region
      _
    $region33: #{tpu_custom_call.1} parent=1 // pred_fallthru
      _
    // Predicated region
    $region34: #{tpu_custom_call.1} parent=1 // pred_check
      _
    $region35: #{tpu_custom_call.1} parent=1 // pred_check_branch
      %32 = sbr.rel (0) target = $region37
    $region36: #{tpu_custom_call.1} parent=1 // pred_region
      _
    $region37: #{tpu_custom_call.1} parent=1 // pred_fallthru
      _
    %v34 = vld [vmem:[%s1] sm:$0xff]
    %v35 = vlaneseq
    %v36 = vand.u32 %v35, 127
    %37 = vset.pattern.permute.xlu0 0
    %38 = vperm.xlu0 %37, %v34
    %v39 = vpop.permute.xlu0 %38
    %vm40 = vcmp.eq.s32.totalorder %v39, %v36
    %v41 = vsel %vm40, 1, 0
    %v42 = vcvt.s32.f32 %v41
    %v43 = vpack.c.bf16 %v42, %v42
    %v44 = vld [vmem:[%s0] sm:$0xf]
    %v45 = vld [vmem:[%s2] sm:$0xf]
    %v46 = vld [vmem:[%s2 + $0x4] sm:$0xf]
    %v47 = vld [vmem:[%s2 + $0x8] sm:$0xf]
    %v48 = vld [vmem:[%s2 + $0xc] sm:$0xf]
    %v49 = vld [vmem:[%s3] sm:$0x3]
    %vm50 = vcmask 31744
    %v52 = vsel %vm50, %v43, 0
    %vm54 = vcmask 1041408
    %v56 = vsel %vm54, %v49, 0
    %58 = vmatprep.subr.bf16.mxu0 0
    %59 = vmatpush1.bf16.msra.mxu0 %v56
    %60 = vmatprep.subr.bf16.mxu0 0
    %61 = vmatpush1.bf16.msra.mxu0 0
    %62 = vmatprep.subr.bf16.mxu0 0
    %63 = vmatpush1.bf16.msra.mxu0 0
    %64 = vmatprep.subr.bf16.mxu0 0
    %65 = vmatpush1.bf16.msra.mxu0 0
    %66 = vmatprep.subr.bf16.mxu0 0
    %67 = vmatpush1.bf16.msra.mxu0 0
    %68 = vmatprep.subr.bf16.mxu0 0
    %69 = vmatpush1.bf16.msra.mxu0 0
    %70 = vmatprep.subr.bf16.mxu0 0
    %71 = vmatpush1.bf16.msra.mxu0 0
    %72 = vmatprep.subr.bf16.mxu0 0
    %73 = vmatpush1.bf16.msra.mxu0 0
    %74 = vmatprep.subr.bf16.mxu0 0
    %75 = vmatpush1.bf16.msra.mxu0 0
    %76 = vmatprep.subr.bf16.mxu0 0
    %77 = vmatpush1.bf16.msra.mxu0 0
    %78 = vmatprep.subr.bf16.mxu0 0
    %79 = vmatpush1.bf16.msra.mxu0 0
    %80 = vmatprep.subr.bf16.mxu0 0
    %81 = vmatpush1.bf16.msra.mxu0 0
    %82 = vmatprep.subr.bf16.mxu0 0
    %83 = vmatpush1.bf16.msra.mxu0 0
    %84 = vmatprep.subr.bf16.mxu0 0
    %85 = vmatpush1.bf16.msra.mxu0 0
    %86 = vmatprep.subr.bf16.mxu0 0
    %87 = vmatpush1.bf16.msra.mxu0 0
    %88 = vmatprep.subr.bf16.mxu0 0
    %89 = vmatpush1.bf16.msra.mxu0 0
    %90 = vmatprep.mubr.bf16.mxu0 0
    %91 = vmatmul.mubr.bf16.gmra.mrb[0].mxu0 %v52
    %v92 = vpop.f32.mrb[0].mxu0
    %v93 = vadd.f32 0.0, %v92
    %v94 = vpop.f32.mrb[0].mxu0
    %v95 = vpop.f32.mrb[0].mxu0
    %v96 = vpop.f32.mrb[0].mxu0
    %97 = vdwg.mxu0
    %v102 = vunpack.c.l.b16 %v45
    %v103 = vunpack.c.l.b16 %v46
    %v104 = vunpack.c.l.b16 %v47
    %v105 = vunpack.c.l.b16 %v48
    %v106 = vpack.c.b16 %v103, %v102
    %v107 = vpack.c.b16 %v105, %v104
    %vm110 = vcmask 261120
    %v112 = vsel %vm110, %v44, 0
    %114 = vmatprep.subr.bf16.mxu0 0
    %115 = vmatpush1.bf16.msra.mxu0 %v106
    %116 = vmatprep.subr.bf16.mxu0 0
    %117 = vmatpush1.bf16.msra.mxu0 %v107
    %118 = vmatprep.subr.bf16.mxu0 0
    %119 = vmatpush1.bf16.msra.mxu0 0
    %120 = vmatprep.subr.bf16.mxu0 0
    %121 = vmatpush1.bf16.msra.mxu0 0
    %122 = vmatprep.subr.bf16.mxu0 0
    %123 = vmatpush1.bf16.msra.mxu0 0
    %124 = vmatprep.subr.bf16.mxu0 0
    %125 = vmatpush1.bf16.msra.mxu0 0
    %126 = vmatprep.subr.bf16.mxu0 0
    %127 = vmatpush1.bf16.msra.mxu0 0
    %128 = vmatprep.subr.bf16.mxu0 0
    %129 = vmatpush1.bf16.msra.mxu0 0
    %130 = vmatprep.subr.bf16.mxu0 0
    %131 = vmatpush1.bf16.msra.mxu0 0
    %132 = vmatprep.subr.bf16.mxu0 0
    %133 = vmatpush1.bf16.msra.mxu0 0
    %134 = vmatprep.subr.bf16.mxu0 0
    %135 = vmatpush1.bf16.msra.mxu0 0
    %136 = vmatprep.subr.bf16.mxu0 0
    %137 = vmatpush1.bf16.msra.mxu0 0
    %138 = vmatprep.subr.bf16.mxu0 0
    %139 = vmatpush1.bf16.msra.mxu0 0
    %140 = vmatprep.subr.bf16.mxu0 0
    %141 = vmatpush1.bf16.msra.mxu0 0
    %142 = vmatprep.subr.bf16.mxu0 0
    %143 = vmatpush1.bf16.msra.mxu0 0
    %144 = vmatprep.subr.bf16.mxu0 0
    %145 = vmatpush1.bf16.msra.mxu0 0
    %146 = vmatprep.mubr.bf16.mxu0 0
    %147 = vmatmul.mubr.bf16.gmra.mrb[0].mxu0 %v112
    %v148 = vpop.f32.mrb[0].mxu0
    %v149 = vadd.f32 %v93, %v148
    %v150 = vpop.f32.mrb[0].mxu0
    %v151 = vpop.f32.mrb[0].mxu0
    %v152 = vpop.f32.mrb[0].mxu0
    %153 = vdwg.mxu0
    %v154 = vld [vmem:[%s4] sm:$0x1]
    %v156 = vlaneseq
    %v157 = vshrl.u32 %v156, 7
    %v158 = vsub.s32 0, %v157
    %v159 = vrot.slane %v154, %v158
    %v161 = vadd.f32 %v149, %v159
    %v162 = vmax.f32 %v161, 0.0
    %v163 = vpack.c.bf16 %v162, %v162
    %v164 = vld [vmem:[%s5] sm:$0xf]
    %v165 = vld [vmem:[%s5 + $0x4] sm:$0xf]
    %v166 = vld [vmem:[%s5 + $0x8] sm:$0xf]
    %v167 = vld [vmem:[%s5 + $0xc] sm:$0xf]
    %v168 = vld [vmem:[%s5 + $0x10] sm:$0xf]
    %v169 = vld [vmem:[%s5 + $0x14] sm:$0xf]
    %v170 = vld [vmem:[%s5 + $0x18] sm:$0xf]
    %v171 = vld [vmem:[%s5 + $0x1c] sm:$0xf]
    %v172 = vld [vmem:[%s5 + $0x20] sm:$0xf]
    %v173 = vld [vmem:[%s5 + $0x24] sm:$0xf]
    %v174 = vld [vmem:[%s5 + $0x28] sm:$0xf]
    %v175 = vld [vmem:[%s5 + $0x2c] sm:$0xf]
    %v176 = vld [vmem:[%s5 + $0x30] sm:$0xf]
    %v177 = vld [vmem:[%s5 + $0x34] sm:$0xf]
    %v178 = vld [vmem:[%s5 + $0x38] sm:$0xf]
    %v179 = vld [vmem:[%s5 + $0x3c] sm:$0xf]
    %v180 = vld [vmem:[%s6] sm:$0x1]
    %v182 = vlaneseq
    %v183 = vshrl.u32 %v182, 7
    %v184 = vsub.s32 0, %v183
    %v185 = vrot.slane %v180, %v184
    %v203 = vunpack.c.l.b16 %v164
    %v204 = vunpack.c.l.b16 %v165
    %v205 = vunpack.c.l.b16 %v166
    %v206 = vunpack.c.l.b16 %v167
    %v207 = vunpack.c.l.b16 %v168
    %v208 = vunpack.c.l.b16 %v169
    %v209 = vunpack.c.l.b16 %v170
    %v210 = vunpack.c.l.b16 %v171
    %v211 = vunpack.c.l.b16 %v172
    %v212 = vunpack.c.l.b16 %v173
    %v213 = vunpack.c.l.b16 %v174
    %v214 = vunpack.c.l.b16 %v175
    %v215 = vunpack.c.l.b16 %v176
    %v216 = vunpack.c.l.b16 %v177
    %v217 = vunpack.c.l.b16 %v178
    %v218 = vunpack.c.l.b16 %v179
    %v219 = vpack.c.b16 %v204, %v203
    %v220 = vpack.c.b16 %v206, %v205
    %v221 = vpack.c.b16 %v208, %v207
    %v222 = vpack.c.b16 %v210, %v209
    %v223 = vpack.c.b16 %v212, %v211
    %v224 = vpack.c.b16 %v214, %v213
    %v225 = vpack.c.b16 %v216, %v215
    %v226 = vpack.c.b16 %v218, %v217
    %235 = vmatprep.subr.bf16.mxu0 0
    %236 = vmatpush1.bf16.msra.mxu0 %v219
    %237 = vmatprep.subr.bf16.mxu0 0
    %238 = vmatpush1.bf16.msra.mxu0 %v220
    %239 = vmatprep.subr.bf16.mxu0 0
    %240 = vmatpush1.bf16.msra.mxu0 %v221
    %241 = vmatprep.subr.bf16.mxu0 0
    %242 = vmatpush1.bf16.msra.mxu0 %v222
    %243 = vmatprep.subr.bf16.mxu0 0
    %244 = vmatpush1.bf16.msra.mxu0 %v223
    %245 = vmatprep.subr.bf16.mxu0 0
    %246 = vmatpush1.bf16.msra.mxu0 %v224
    %247 = vmatprep.subr.bf16.mxu0 0
    %248 = vmatpush1.bf16.msra.mxu0 %v225
    %249 = vmatprep.subr.bf16.mxu0 0
    %250 = vmatpush1.bf16.msra.mxu0 %v226
    %251 = vmatprep.subr.bf16.mxu0 0
    %252 = vmatpush1.bf16.msra.mxu0 0
    %253 = vmatprep.subr.bf16.mxu0 0
    %254 = vmatpush1.bf16.msra.mxu0 0
    %255 = vmatprep.subr.bf16.mxu0 0
    %256 = vmatpush1.bf16.msra.mxu0 0
    %257 = vmatprep.subr.bf16.mxu0 0
    %258 = vmatpush1.bf16.msra.mxu0 0
    %259 = vmatprep.subr.bf16.mxu0 0
    %260 = vmatpush1.bf16.msra.mxu0 0
    %261 = vmatprep.subr.bf16.mxu0 0
    %262 = vmatpush1.bf16.msra.mxu0 0
    %263 = vmatprep.subr.bf16.mxu0 0
    %264 = vmatpush1.bf16.msra.mxu0 0
    %265 = vmatprep.subr.bf16.mxu0 0
    %266 = vmatpush1.bf16.msra.mxu0 0
    %267 = vmatprep.mubr.bf16.mxu0 0
    %268 = vmatmul.mubr.bf16.gmra.mrb[0].mxu0 %v163
    %v269 = vpop.f32.mrb[0].mxu0
    %v270 = vadd.f32 %v185, %v269
    %v271 = vpop.f32.mrb[0].mxu0
    %v272 = vpop.f32.mrb[0].mxu0
    %v273 = vpop.f32.mrb[0].mxu0
    %274 = vdwg.mxu0
    %v275 = vmax.f32 %v270, 0.0
    %v276 = vpack.c.bf16 %v275, %v275
    %v277 = vld [vmem:[%s7] sm:$0xf]
    %v278 = vld [vmem:[%s7 + $0x4] sm:$0xf]
    %v279 = vld [vmem:[%s7 + $0x8] sm:$0xf]
    %v280 = vld [vmem:[%s7 + $0xc] sm:$0xf]
    %v281 = vld [vmem:[%s7 + $0x10] sm:$0xf]
    %v282 = vld [vmem:[%s7 + $0x14] sm:$0xf]
    %v283 = vld [vmem:[%s7 + $0x18] sm:$0xf]
    %v284 = vld [vmem:[%s7 + $0x1c] sm:$0xf]
    %v285 = vld [vmem:[%s7 + $0x20] sm:$0xf]
    %v286 = vld [vmem:[%s7 + $0x24] sm:$0xf]
    %v287 = vld [vmem:[%s7 + $0x28] sm:$0xf]
    %v288 = vld [vmem:[%s7 + $0x2c] sm:$0xf]
    %v289 = vld [vmem:[%s7 + $0x30] sm:$0xf]
    %v290 = vld [vmem:[%s7 + $0x34] sm:$0xf]
    %v291 = vld [vmem:[%s7 + $0x38] sm:$0xf]
    %v292 = vld [vmem:[%s7 + $0x3c] sm:$0xf]
    %v293 = vld [vmem:[%s8] sm:$0x1]
    %v295 = vlaneseq
    %v296 = vshrl.u32 %v295, 7
    %v297 = vsub.s32 0, %v296
    %v298 = vrot.slane %v293, %v297
    %v316 = vunpack.c.l.b16 %v277
    %v317 = vunpack.c.l.b16 %v278
    %v318 = vunpack.c.l.b16 %v279
    %v319 = vunpack.c.l.b16 %v280
    %v320 = vunpack.c.l.b16 %v281
    %v321 = vunpack.c.l.b16 %v282
    %v322 = vunpack.c.l.b16 %v283
    %v323 = vunpack.c.l.b16 %v284
    %v324 = vunpack.c.l.b16 %v285
    %v325 = vunpack.c.l.b16 %v286
    %v326 = vunpack.c.l.b16 %v287
    %v327 = vunpack.c.l.b16 %v288
    %v328 = vunpack.c.l.b16 %v289
    %v329 = vunpack.c.l.b16 %v290
    %v330 = vunpack.c.l.b16 %v291
    %v331 = vunpack.c.l.b16 %v292
    %v332 = vpack.c.b16 %v317, %v316
    %v333 = vpack.c.b16 %v319, %v318
    %v334 = vpack.c.b16 %v321, %v320
    %v335 = vpack.c.b16 %v323, %v322
    %v336 = vpack.c.b16 %v325, %v324
    %v337 = vpack.c.b16 %v327, %v326
    %v338 = vpack.c.b16 %v329, %v328
    %v339 = vpack.c.b16 %v331, %v330
    %348 = vmatprep.subr.bf16.mxu0 0
    %349 = vmatpush1.bf16.msra.mxu0 %v332
    %350 = vmatprep.subr.bf16.mxu0 0
    %351 = vmatpush1.bf16.msra.mxu0 %v333
    %352 = vmatprep.subr.bf16.mxu0 0
    %353 = vmatpush1.bf16.msra.mxu0 %v334
    %354 = vmatprep.subr.bf16.mxu0 0
    %355 = vmatpush1.bf16.msra.mxu0 %v335
    %356 = vmatprep.subr.bf16.mxu0 0
    %357 = vmatpush1.bf16.msra.mxu0 %v336
    %358 = vmatprep.subr.bf16.mxu0 0
    %359 = vmatpush1.bf16.msra.mxu0 %v337
    %360 = vmatprep.subr.bf16.mxu0 0
    %361 = vmatpush1.bf16.msra.mxu0 %v338
    %362 = vmatprep.subr.bf16.mxu0 0
    %363 = vmatpush1.bf16.msra.mxu0 %v339
    %364 = vmatprep.subr.bf16.mxu0 0
    %365 = vmatpush1.bf16.msra.mxu0 0
    %366 = vmatprep.subr.bf16.mxu0 0
    %367 = vmatpush1.bf16.msra.mxu0 0
    %368 = vmatprep.subr.bf16.mxu0 0
    %369 = vmatpush1.bf16.msra.mxu0 0
    %370 = vmatprep.subr.bf16.mxu0 0
    %371 = vmatpush1.bf16.msra.mxu0 0
    %372 = vmatprep.subr.bf16.mxu0 0
    %373 = vmatpush1.bf16.msra.mxu0 0
    %374 = vmatprep.subr.bf16.mxu0 0
    %375 = vmatpush1.bf16.msra.mxu0 0
    %376 = vmatprep.subr.bf16.mxu0 0
    %377 = vmatpush1.bf16.msra.mxu0 0
    %378 = vmatprep.subr.bf16.mxu0 0
    %379 = vmatpush1.bf16.msra.mxu0 0
    %380 = vmatprep.mubr.bf16.mxu0 0
    %381 = vmatmul.mubr.bf16.gmra.mrb[0].mxu0 %v276
    %v382 = vpop.f32.mrb[0].mxu0
    %v383 = vadd.f32 %v298, %v382
    %v384 = vpop.f32.mrb[0].mxu0
    %v385 = vpop.f32.mrb[0].mxu0
    %v386 = vpop.f32.mrb[0].mxu0
    %387 = vdwg.mxu0
    %v388 = vmax.f32 %v383, 0.0
    %389 = vst.msk [vmem:[#allocation2] sm:$0xff] %vm110, %v388
    // Predicated region
    $region38: #{tpu_custom_call.1} parent=1 // pred_check
      _
    $region39: #{tpu_custom_call.1} parent=1 // pred_check_branch
      %391 = sbr.rel (0) target = $region41
    $region40: #{tpu_custom_call.1} parent=1 // pred_region
      %s393 = ssub.s32 128, 128
      %394 = vsyncadd [#allocation3], %s393
      %s396 = sshll.u32 [#allocation2], 4
      %s397 = int_to_ptr.vmem [resolvable:$true] %s396
      %399 = dma.vmem_to_hbm [thread:$0]  %s397, 128, %s9, [#allocation3]
    $region41: #{tpu_custom_call.1} parent=1 // pred_fallthru
      _
    // Predicated region
    $region42: #{tpu_custom_call.1} parent=1 // pred_check
      _
    $region43: #{tpu_custom_call.1} parent=1 // pred_check_branch
      %401 = sbr.rel (0) target = $region45
    $region44: #{tpu_custom_call.1} parent=1 // pred_region
      %402 = dma.done [#allocation3], 128
    $region45: #{tpu_custom_call.1} parent=1 // pred_fallthru
      _
    %403 = vsyncpa [#allocation3], 1

</llo_original>
